<compile_context>
chip_gen: v7x
topology: tpu7x:2x2x1
jax: 0.10.0
libtpu: 0.0.40
codegen_flags: <defaults>
</compile_context>

<pallas_src>
import functools

import jax
import jax.numpy as jnp
from jax.experimental import pallas as pl
from jax.experimental.pallas import tpu as pltpu

# Force full-f32 matmul/conv precision everywhere (kernel dot, wrapper GEMM and
# the XLA reference) so the numerical comparison below is apples-to-apples.
jax.config.update("jax_default_matmul_precision", "highest")


# ----------------------------------------------------------------------------
# Pallas kernel: grouped correlation for one (sequence, image) pair.
# ----------------------------------------------------------------------------
def _grouped_corr_kernel(H, W, fH, fW, Ho, w_ref, f_ref, o_ref, pt_ref):
    """w_ref : (T, C)      projected filter taps (tap-major, C on lanes)
       f_ref : (C, H*W)    feature slab, native NCHW layout flattened (lane-dense)
       o_ref : (1, Ho*Wp)  output rows strided by Wp (cols >= Wo are junk,
                           sliced off by the wrapper)
       pt_ref: (T, PP)     VMEM scratch: zero-padded taps
    """
    T = fH * fW
    ph, pw = fH // 2, fW // 2
    Hp, Wp = H + 2 * ph, W + 2 * pw

    # (1) Channel reduction on the MXU:
    #     taps[t, y*W + x] = sum_c w[t, c] * feat[c, y, x]
    taps = jnp.dot(w_ref[...], f_ref[...], preferred_element_type=jnp.float32)

    # (2) Zero-padded, row-gapped copy of the (small) taps into VMEM:
    #     pt[t, (y+ph)*Wp + pw + x] = taps[t, y*W + x]
    #     The conv halo is handled here, on a C-times-smaller tensor, instead
    #     of a jnp.pad of the feature tensor in HBM.
    pt_ref[...] = jnp.zeros_like(pt_ref)
    for y in range(H):                       # small static loop (H rows)
        dst = (y + ph) * Wp + pw
        pt_ref[:, dst:dst + W] = taps[:, y * W:(y + 1) * W]

    # (3) Combine the fH*fW tap rows with static shifted adds (tiny vs matmul):
    #     out[yo*Wp + xo] = sum_t pt[t, (yo + fy)*Wp + (xo + fx)]
    ptv = pt_ref[...]
    L = Ho * Wp
    acc = jnp.zeros((1, L), jnp.float32)
    for t in range(T):                       # fH*fW static taps
        d = (t // fW) * Wp + (t % fW)
        acc = acc + ptv[t:t + 1, d:d + L]
    o_ref[...] = acc.astype(o_ref.dtype)


def apply_filter(feat, filt_tc, fH, fW):
    """feat: (NI, NS, C, H, W) f32.  filt_tc: (NS, fH*fW, C) f32 (tap-major)."""
    NI, NS, C, H, W = feat.shape
    T = fH * fW
    ph, pw = fH // 2, fW // 2
    Hp, Wp = H + 2 * ph, W + 2 * pw
    Ho = H + 2 * ph - fH + 1
    Wo = W + 2 * pw - fW + 1
    HW = H * W
    L = Ho * Wp
    PP = Hp * Wp + fW                     # scratch width >= max shifted-slice end

    # Free reshape (merges the two minor dims); no padded copy of feat in HBM.
    feat_flat = feat.reshape(NI, NS, C, HW)

    kernel = functools.partial(_grouped_corr_kernel, H, W, fH, fW, Ho)
    out4 = pl.pallas_call(
        kernel,
        out_shape=jax.ShapeDtypeStruct((NI, NS, 1, L), jnp.float32),
        grid=(NS, NI),
        in_specs=[
            # filter block depends only on the outer (sequence) axis ->
            # stays resident across the inner image loop.
            pl.BlockSpec((None, T, C), lambda s, i: (s, 0, 0)),
            pl.BlockSpec((None, None, C, HW), lambda s, i: (i, s, 0, 0)),
        ],
        out_specs=pl.BlockSpec((None, None, 1, L), lambda s, i: (i, s, 0, 0)),
        scratch_shapes=[pltpu.VMEM((T, PP), jnp.float32)],
        compiler_params=pltpu.CompilerParams(
            dimension_semantics=("parallel", "arbitrary")
        ),
    )(filt_tc, feat_flat)

    # Output rows are Wp-strided; drop the junk columns -> (NI, NS, Ho, Wo).
    return out4.reshape(NI, NS, Ho, Wp)[:, :, :, :Wo]


# ----------------------------------------------------------------------------
# Module wrapper
# ----------------------------------------------------------------------------
class LinearFilterClassifierPallas:
    def __init__(self, num_channels, project_filter=True, key=None):
        self.num_channels = num_channels
        self.project_filter = project_filter
        if project_filter:
            if key is None:
                key = jax.random.PRNGKey(0)
            kw, kb = jax.random.split(key)
            bound = 1.0 / jnp.sqrt(num_channels)     # nn.Linear default init range
            self.weight = jax.random.uniform(
                kw, (num_channels, num_channels), jnp.float32, -bound, bound)
            self.bias = jax.random.uniform(
                kb, (num_channels,), jnp.float32, -bound, bound)

    def __call__(self, feat, filt):
        NS, C, fH, fW = filt.shape
        T = fH * fW
        if self.project_filter:
            # Per perf review: this GEMM is tiny (NS*fH*fW rows of C); a
            # dedicated pallas_call costs more in dispatch + HBM round trip than
            # it computes, so it is left to XLA (which also folds the weight
            # transpose into the dot instead of an in-kernel XLU transpose).
            rows = filt.reshape(-1, C)                  # exact PyTorch reshape semantics
            proj = rows @ self.weight.T + self.bias     # (NS*T, C)
            filt_proj = proj.reshape(NS, C, T)          # == .reshape(filt.shape), (fH,fW) merged
        else:
            filt_proj = filt.reshape(NS, C, T)
        # Tap-major, channels-last layout: MXU LHS inside the conv kernel.
        filt_tc = jnp.transpose(filt_proj, (0, 2, 1))   # (NS, T, C), tiny
        return apply_filter(feat, filt_tc, fH, fW)


# ----------------------------------------------------------------------------
# Pure-JAX reference (validation only)
# ----------------------------------------------------------------------------
def _reference_forward(feat, filt, weight, bias):
    C = weight.shape[0]
    filt_proj = (filt.reshape(-1, C) @ weight.T + bias).reshape(filt.shape)
    NI, NS, Cc, H, W = feat.shape
    fH, fW = filt.shape[-2], filt.shape[-1]
    x = feat.reshape(NI, NS * Cc, H, W)
    out = jax.lax.conv_general_dilated(
        x,
        filt_proj,
        window_strides=(1, 1),
        padding=((fH // 2, fH // 2), (fW // 2, fW // 2)),
        dimension_numbers=("NCHW", "OIHW", "NCHW"),
        feature_group_count=NS,
    )
    return out.reshape(NI, NS, out.shape[-2], out.shape[-1])


if __name__ == "__main__":
    key = jax.random.PRNGKey(0)
    k_feat, k_filt, k_param = jax.random.split(key, 3)

    num_images, num_sequences = 2, 3
    num_channels, H, W = 32, 16, 16
    fH, fW = 3, 3

    feat = jax.random.normal(
        k_feat, (num_images, num_sequences, num_channels, H, W), jnp.float32)
    filt = jax.random.normal(
        k_filt, (num_sequences, num_channels, fH, fW), jnp.float32)

    module = LinearFilterClassifierPallas(num_channels, project_filter=True, key=k_param)

    out = jax.block_until_ready(module(feat, filt))

    ref = _reference_forward(feat, filt, module.weight, module.bias)
    assert out.shape == (num_images, num_sequences, H, W), out.shape
    # Tolerance sized to also cover reduced-precision MXU passes for f32 matmuls,
    # should the backend not honor the "highest" precision request.
    assert jnp.allclose(out, ref, rtol=5e-3, atol=5e-2), (
        float(jnp.max(jnp.abs(out - ref))))

    print("KERNEL_OK")
</pallas_src>

<mosaic_0001>
module attributes {stable_mosaic.version = 11 : i64} {
  func.func @_grouped_corr_kernel(%arg0: i32, %arg1: i32, %arg2: memref<1x9x32xf32, #tpu.memory_space<vmem>>, %arg3: memref<1x1x32x256xf32, #tpu.memory_space<vmem>>, %arg4: memref<1x1x1x288xf32, #tpu.memory_space<vmem>>, %arg5: memref<9x327xf32, #tpu.memory_space<vmem>>) attributes {dimension_semantics = [#tpu.dimension_semantics<parallel>, #tpu.dimension_semantics<arbitrary>], iteration_bounds = array<i64: 3, 2>, scalar_prefetch = 0 : i64, scratch_operands = 1 : i64, tpu.core_type = #tpu.core_type<tc>, window_params = [{transform_indices = @transform_0, window_bounds = array<i64: 1, 9, 32>}, {transform_indices = @transform_1, window_bounds = array<i64: 1, 1, 32, 256>}, {transform_indices = @transform_2, window_bounds = array<i64: 1, 1, 1, 288>}]} {
    %c0 = arith.constant 0 : index
    %c0_0 = arith.constant 0 : index
    %c0_1 = arith.constant 0 : index
    %0 = vector.load %arg2[%c0, %c0_0, %c0_1] : memref<1x9x32xf32, #tpu.memory_space<vmem>>, vector<1x9x32xf32>
    %1 = vector.shape_cast %0 : vector<1x9x32xf32> to vector<9x32xf32>
    %c0_2 = arith.constant 0 : index
    %c0_3 = arith.constant 0 : index
    %c0_4 = arith.constant 0 : index
    %c0_5 = arith.constant 0 : index
    %2 = vector.load %arg3[%c0_2, %c0_3, %c0_4, %c0_5] : memref<1x1x32x256xf32, #tpu.memory_space<vmem>>, vector<1x1x32x256xf32>
    %3 = vector.shape_cast %2 : vector<1x1x32x256xf32> to vector<32x256xf32>
    %cst = arith.constant dense<0.000000e+00> : vector<9x256xf32>
    %4 = tpu.matmul %1, %3, %cst {dimension_numbers = #tpu.dot_dimension_numbers<[1], [0], [0], [1], [0, 0, 1, 1], [], []>, precision = #tpu.contract_precision<fp32>} : vector<9x32xf32>, vector<32x256xf32>, vector<9x256xf32> -> vector<9x256xf32>
    %cst_6 = arith.constant 0.000000e+00 : f32
    %5 = vector.broadcast %cst_6 : f32 to vector<9x327xf32>
    %c0_7 = arith.constant 0 : index
    %c0_8 = arith.constant 0 : index
    %6 = vector.load %arg5[%c0_7, %c0_8] : memref<9x327xf32, #tpu.memory_space<vmem>>, vector<9x327xf32>
    tpu.vector_store %arg5[%c0_7, %c0_8], %5 {strides = array<i32>} : memref<9x327xf32, #tpu.memory_space<vmem>>, vector<9x327xf32>,
    %7 = vector.extract_strided_slice %4 {offsets = [0, 0], sizes = [9, 16], strides = [1, 1]} : vector<9x256xf32> to vector<9x16xf32>
    %c0_9 = arith.constant 0 : index
    %c19 = arith.constant 19 : index
    %8 = vector.load %arg5[%c0_9, %c19] : memref<9x327xf32, #tpu.memory_space<vmem>>, vector<9x16xf32>
    tpu.vector_store %arg5[%c0_9, %c19], %7 {strides = array<i32>} : memref<9x327xf32, #tpu.memory_space<vmem>>, vector<9x16xf32>,
    %9 = vector.extract_strided_slice %4 {offsets = [0, 16], sizes = [9, 16], strides = [1, 1]} : vector<9x256xf32> to vector<9x16xf32>
    %c0_10 = arith.constant 0 : index
    %c37 = arith.constant 37 : index
    %10 = vector.load %arg5[%c0_10, %c37] : memref<9x327xf32, #tpu.memory_space<vmem>>, vector<9x16xf32>
    tpu.vector_store %arg5[%c0_10, %c37], %9 {strides = array<i32>} : memref<9x327xf32, #tpu.memory_space<vmem>>, vector<9x16xf32>,
    %11 = vector.extract_strided_slice %4 {offsets = [0, 32], sizes = [9, 16], strides = [1, 1]} : vector<9x256xf32> to vector<9x16xf32>
    %c0_11 = arith.constant 0 : index
    %c55 = arith.constant 55 : index
    %12 = vector.load %arg5[%c0_11, %c55] : memref<9x327xf32, #tpu.memory_space<vmem>>, vector<9x16xf32>
    tpu.vector_store %arg5[%c0_11, %c55], %11 {strides = array<i32>} : memref<9x327xf32, #tpu.memory_space<vmem>>, vector<9x16xf32>,
    %13 = vector.extract_strided_slice %4 {offsets = [0, 48], sizes = [9, 16], strides = [1, 1]} : vector<9x256xf32> to vector<9x16xf32>
    %c0_12 = arith.constant 0 : index
    %c73 = arith.constant 73 : index
    %14 = vector.load %arg5[%c0_12, %c73] : memref<9x327xf32, #tpu.memory_space<vmem>>, vector<9x16xf32>
    tpu.vector_store %arg5[%c0_12, %c73], %13 {strides = array<i32>} : memref<9x327xf32, #tpu.memory_space<vmem>>, vector<9x16xf32>,
    %15 = vector.extract_strided_slice %4 {offsets = [0, 64], sizes = [9, 16], strides = [1, 1]} : vector<9x256xf32> to vector<9x16xf32>
    %c0_13 = arith.constant 0 : index
    %c91 = arith.constant 91 : index
    %16 = vector.load %arg5[%c0_13, %c91] : memref<9x327xf32, #tpu.memory_space<vmem>>, vector<9x16xf32>
    tpu.vector_store %arg5[%c0_13, %c91], %15 {strides = array<i32>} : memref<9x327xf32, #tpu.memory_space<vmem>>, vector<9x16xf32>,
    %17 = vector.extract_strided_slice %4 {offsets = [0, 80], sizes = [9, 16], strides = [1, 1]} : vector<9x256xf32> to vector<9x16xf32>
    %c0_14 = arith.constant 0 : index
    %c109 = arith.constant 109 : index
    %18 = vector.load %arg5[%c0_14, %c109] : memref<9x327xf32, #tpu.memory_space<vmem>>, vector<9x16xf32>
    tpu.vector_store %arg5[%c0_14, %c109], %17 {strides = array<i32>} : memref<9x327xf32, #tpu.memory_space<vmem>>, vector<9x16xf32>,
    %19 = vector.extract_strided_slice %4 {offsets = [0, 96], sizes = [9, 16], strides = [1, 1]} : vector<9x256xf32> to vector<9x16xf32>
    %c0_15 = arith.constant 0 : index
    %c127 = arith.constant 127 : index
    %20 = vector.load %arg5[%c0_15, %c127] : memref<9x327xf32, #tpu.memory_space<vmem>>, vector<9x16xf32>
    tpu.vector_store %arg5[%c0_15, %c127], %19 {strides = array<i32>} : memref<9x327xf32, #tpu.memory_space<vmem>>, vector<9x16xf32>,
    %21 = vector.extract_strided_slice %4 {offsets = [0, 112], sizes = [9, 16], strides = [1, 1]} : vector<9x256xf32> to vector<9x16xf32>
    %c0_16 = arith.constant 0 : index
    %c145 = arith.constant 145 : index
    %22 = vector.load %arg5[%c0_16, %c145] : memref<9x327xf32, #tpu.memory_space<vmem>>, vector<9x16xf32>
    tpu.vector_store %arg5[%c0_16, %c145], %21 {strides = array<i32>} : memref<9x327xf32, #tpu.memory_space<vmem>>, vector<9x16xf32>,
    %23 = vector.extract_strided_slice %4 {offsets = [0, 128], sizes = [9, 16], strides = [1, 1]} : vector<9x256xf32> to vector<9x16xf32>
    %c0_17 = arith.constant 0 : index
    %c163 = arith.constant 163 : index
    %24 = vector.load %arg5[%c0_17, %c163] : memref<9x327xf32, #tpu.memory_space<vmem>>, vector<9x16xf32>
    tpu.vector_store %arg5[%c0_17, %c163], %23 {strides = array<i32>} : memref<9x327xf32, #tpu.memory_space<vmem>>, vector<9x16xf32>,
    %25 = vector.extract_strided_slice %4 {offsets = [0, 144], sizes = [9, 16], strides = [1, 1]} : vector<9x256xf32> to vector<9x16xf32>
    %c0_18 = arith.constant 0 : index
    %c181 = arith.constant 181 : index
    %26 = vector.load %arg5[%c0_18, %c181] : memref<9x327xf32, #tpu.memory_space<vmem>>, vector<9x16xf32>
    tpu.vector_store %arg5[%c0_18, %c181], %25 {strides = array<i32>} : memref<9x327xf32, #tpu.memory_space<vmem>>, vector<9x16xf32>,
    %27 = vector.extract_strided_slice %4 {offsets = [0, 160], sizes = [9, 16], strides = [1, 1]} : vector<9x256xf32> to vector<9x16xf32>
    %c0_19 = arith.constant 0 : index
    %c199 = arith.constant 199 : index
    %28 = vector.load %arg5[%c0_19, %c199] : memref<9x327xf32, #tpu.memory_space<vmem>>, vector<9x16xf32>
    tpu.vector_store %arg5[%c0_19, %c199], %27 {strides = array<i32>} : memref<9x327xf32, #tpu.memory_space<vmem>>, vector<9x16xf32>,
    %29 = vector.extract_strided_slice %4 {offsets = [0, 176], sizes = [9, 16], strides = [1, 1]} : vector<9x256xf32> to vector<9x16xf32>
    %c0_20 = arith.constant 0 : index
    %c217 = arith.constant 217 : index
    %30 = vector.load %arg5[%c0_20, %c217] : memref<9x327xf32, #tpu.memory_space<vmem>>, vector<9x16xf32>
    tpu.vector_store %arg5[%c0_20, %c217], %29 {strides = array<i32>} : memref<9x327xf32, #tpu.memory_space<vmem>>, vector<9x16xf32>,
    %31 = vector.extract_strided_slice %4 {offsets = [0, 192], sizes = [9, 16], strides = [1, 1]} : vector<9x256xf32> to vector<9x16xf32>
    %c0_21 = arith.constant 0 : index
    %c235 = arith.constant 235 : index
    %32 = vector.load %arg5[%c0_21, %c235] : memref<9x327xf32, #tpu.memory_space<vmem>>, vector<9x16xf32>
    tpu.vector_store %arg5[%c0_21, %c235], %31 {strides = array<i32>} : memref<9x327xf32, #tpu.memory_space<vmem>>, vector<9x16xf32>,
    %33 = vector.extract_strided_slice %4 {offsets = [0, 208], sizes = [9, 16], strides = [1, 1]} : vector<9x256xf32> to vector<9x16xf32>
    %c0_22 = arith.constant 0 : index
    %c253 = arith.constant 253 : index
    %34 = vector.load %arg5[%c0_22, %c253] : memref<9x327xf32, #tpu.memory_space<vmem>>, vector<9x16xf32>
    tpu.vector_store %arg5[%c0_22, %c253], %33 {strides = array<i32>} : memref<9x327xf32, #tpu.memory_space<vmem>>, vector<9x16xf32>,
    %35 = vector.extract_strided_slice %4 {offsets = [0, 224], sizes = [9, 16], strides = [1, 1]} : vector<9x256xf32> to vector<9x16xf32>
    %c0_23 = arith.constant 0 : index
    %c271 = arith.constant 271 : index
    %36 = vector.load %arg5[%c0_23, %c271] : memref<9x327xf32, #tpu.memory_space<vmem>>, vector<9x16xf32>
    tpu.vector_store %arg5[%c0_23, %c271], %35 {strides = array<i32>} : memref<9x327xf32, #tpu.memory_space<vmem>>, vector<9x16xf32>,
    %37 = vector.extract_strided_slice %4 {offsets = [0, 240], sizes = [9, 16], strides = [1, 1]} : vector<9x256xf32> to vector<9x16xf32>
    %c0_24 = arith.constant 0 : index
    %c289 = arith.constant 289 : index
    %38 = vector.load %arg5[%c0_24, %c289] : memref<9x327xf32, #tpu.memory_space<vmem>>, vector<9x16xf32>
    tpu.vector_store %arg5[%c0_24, %c289], %37 {strides = array<i32>} : memref<9x327xf32, #tpu.memory_space<vmem>>, vector<9x16xf32>,
    %c0_25 = arith.constant 0 : index
    %c0_26 = arith.constant 0 : index
    %39 = vector.load %arg5[%c0_25, %c0_26] : memref<9x327xf32, #tpu.memory_space<vmem>>, vector<9x327xf32>
    %cst_27 = arith.constant 0.000000e+00 : f32
    %40 = vector.broadcast %cst_27 : f32 to vector<1x288xf32>
    %41 = vector.extract_strided_slice %39 {offsets = [0, 0], sizes = [1, 288], strides = [1, 1]} : vector<9x327xf32> to vector<1x288xf32>
    %42 = arith.addf %40, %41 : vector<1x288xf32>
    %43 = vector.extract_strided_slice %39 {offsets = [1, 1], sizes = [1, 288], strides = [1, 1]} : vector<9x327xf32> to vector<1x288xf32>
    %44 = arith.addf %42, %43 : vector<1x288xf32>
    %45 = vector.extract_strided_slice %39 {offsets = [2, 2], sizes = [1, 288], strides = [1, 1]} : vector<9x327xf32> to vector<1x288xf32>
    %46 = arith.addf %44, %45 : vector<1x288xf32>
    %47 = vector.extract_strided_slice %39 {offsets = [3, 18], sizes = [1, 288], strides = [1, 1]} : vector<9x327xf32> to vector<1x288xf32>
    %48 = arith.addf %46, %47 : vector<1x288xf32>
    %49 = vector.extract_strided_slice %39 {offsets = [4, 19], sizes = [1, 288], strides = [1, 1]} : vector<9x327xf32> to vector<1x288xf32>
    %50 = arith.addf %48, %49 : vector<1x288xf32>
    %51 = vector.extract_strided_slice %39 {offsets = [5, 20], sizes = [1, 288], strides = [1, 1]} : vector<9x327xf32> to vector<1x288xf32>
    %52 = arith.addf %50, %51 : vector<1x288xf32>
    %53 = vector.extract_strided_slice %39 {offsets = [6, 36], sizes = [1, 288], strides = [1, 1]} : vector<9x327xf32> to vector<1x288xf32>
    %54 = arith.addf %52, %53 : vector<1x288xf32>
    %55 = vector.extract_strided_slice %39 {offsets = [7, 37], sizes = [1, 288], strides = [1, 1]} : vector<9x327xf32> to vector<1x288xf32>
    %56 = arith.addf %54, %55 : vector<1x288xf32>
    %57 = vector.extract_strided_slice %39 {offsets = [8, 38], sizes = [1, 288], strides = [1, 1]} : vector<9x327xf32> to vector<1x288xf32>
    %58 = arith.addf %56, %57 : vector<1x288xf32>
    %c0_28 = arith.constant 0 : index
    %c0_29 = arith.constant 0 : index
    %c0_30 = arith.constant 0 : index
    %c0_31 = arith.constant 0 : index
    %59 = vector.load %arg4[%c0_28, %c0_29, %c0_30, %c0_31] : memref<1x1x1x288xf32, #tpu.memory_space<vmem>>, vector<1x1x1x288xf32>
    %60 = vector.shape_cast %59 : vector<1x1x1x288xf32> to vector<1x288xf32>
    %61 = vector.shape_cast %58 : vector<1x288xf32> to vector<1x1x1x288xf32>
    tpu.vector_store %arg4[%c0_28, %c0_29, %c0_30, %c0_31], %61 {strides = array<i32>} : memref<1x1x1x288xf32, #tpu.memory_space<vmem>>, vector<1x1x1x288xf32>,
    return
  }
  func.func @transform_0(%arg0: i32, %arg1: i32) -> (i32, i32, i32) {
    %c0_i32 = arith.constant 0 : i32
    %c0_i32_0 = arith.constant 0 : i32
    %c0_i32_1 = arith.constant 0 : i32
    return %arg0, %c0_i32, %c0_i32_0 : i32, i32, i32
  }
  func.func @transform_1(%arg0: i32, %arg1: i32) -> (i32, i32, i32, i32) {
    %c0_i32 = arith.constant 0 : i32
    %c0_i32_0 = arith.constant 0 : i32
    %c0_i32_1 = arith.constant 0 : i32
    return %arg1, %arg0, %c0_i32, %c0_i32_0 : i32, i32, i32, i32
  }
  func.func @transform_2(%arg0: i32, %arg1: i32) -> (i32, i32, i32, i32) {
    %c0_i32 = arith.constant 0 : i32
    %c0_i32_0 = arith.constant 0 : i32
    %c0_i32_1 = arith.constant 0 : i32
    return %arg1, %arg0, %c0_i32, %c0_i32_0 : i32, i32, i32, i32
  }
}

</mosaic_0001>

<llo_original>
// kernel: tpu_custom_call.1
$region0: #{tpu_custom_call.1}
  #allocation0 [shape = 'u32[]', space=smem, size = 0x4, offset = 0x4, fixed_abs, tag = 'smem constant byte address 0x4 - core index']
  #allocation1 [shape = 'u32[144,128]{1,0:T(1,128)}', space=vmem, size = 0x12000, scoped, tag = 'internal scratch']
  #allocation2 [shape = 'f32[9,327]{1,0:T(8,128)}', space=vmem, size = 0x6000, scoped, tag = 'scratch operand']
  %s0 = inlined_call_operand.vmem [shape: f32[3,9,32], index: 0, kind: input, shape index: {}]
  %s1 = inlined_call_operand.hbm [shape: f32[2,3,32,256], index: 1, kind: input, shape index: {}]
  %s2 = inlined_call_operand.hbm [shape: f32[2,3,1,288], index: 2, kind: output, shape index: {}]
  %s3 = sld [smem:[#allocation0]]
  $region45: #{tpu_custom_call.1} parent=0
    _
  %s5 = ssub.s32 1, %s3
  %s6 = scalar_select 0, %s5, %s3
  $region1: #{tpu_custom_call.1} parent=0
    #allocation3 [shape = 'u8[65536]{0}', space=vmem, size = 0x10000, scoped, tag = 'input window, operand 1']
    #allocation4 [shape = 's32[2]{0}', space=sflag, size = 0x8, scoped, tag = 'scoped memory for tpu_custom_call.1']
    #allocation5 [shape = 's32[2]{0}', space=sflag, size = 0x8, scoped, tag = 'scoped memory for tpu_custom_call.1']
    #allocation6 [shape = 'u8[3072]{0}', space=vmem, size = 0xc00, scoped, tag = 'output window, operand 0']
    %7 = vsyncpa [#allocation4], 0
    %s8 = scalar_lea.sflag [#allocation4], 1
    %9 = vsyncpa %s8, 0
    %10 = vsyncpa [#allocation5], 0
    %s11 = scalar_lea.sflag [#allocation5], 1
    %12 = vsyncpa %s11, 0
    loop: start=0, step=1, limit=8
    $region2: #{tpu_custom_call.1} parent=1 // loop_pre_header
      _
    $region3: #{tpu_custom_call.1} parent=1 // loop_header
      %s14 = sphi 0, %s18
      %p15 = scmp.ge.s32.totalorder %s14, 8
      %s21 = sphi 0, %s33
      %s22 = sphi 0, %s29
      %s23 = sphi 0, %s21
      %s24 = sphi 0, %s22
      %s25 = sphi 0, %s23
      %s26 = sphi 0, %s24
      %s36 = sphi 0, %s38
      %s39 = sphi 0, %s36
      %s40 = sphi 0, %s39
      %s56 = sphi 0, %s40
      %s64 = sphi 0, %s66
      %s67 = sphi 0, %s64
      %s68 = sphi 0, %s67
      %s84 = sphi 0, %s68
      %s92 = sphi 0, %s94
      %s95 = sphi 0, %s92
      %s96 = sphi 0, %s95
      %s112 = sphi 0, %s96
    $region4: #{tpu_custom_call.1} parent=1 // loop_header_branch
      %17 = sbr.rel (%p15) target = $region8
    $region5: #{tpu_custom_call.1} parent=1 // loop_body
      %s19 = ssub.s32 %s14, 1
      %s20 = ssub.s32 %s14, 2
      %s27 = sadd.s32 1, %s22
      %p28 = scmp.ge.s32.totalorder %s27, 2
      %s29 = scalar_select %p28, 0, %s27
      %s30 = sadd.s32 1, %s21
      %s31 = scalar_select %p28, %s30, %s21
      %p32 = scmp.ge.s32.totalorder %s31, 3
      %s33 = scalar_select %p32, 0, %s31
      %s34 = ssub.s32 %s21, %s33
      %p35 = scmp.eq.s32.totalorder %s34, 0
      %s37 = sadd.s32 %s36, 1
      %s38 = scalar_select %p35, %s36, %s37
      %p41 = pneg %p35
      %p42 = scmp.eq.s32.totalorder %s14, 5
      %p43 = por %p41, %p42
      %p44 = scmp.ne.s32.totalorder %s36, %s39
      %p45 = scmp.eq.s32.totalorder %s14, 0
      %p46 = por %p44, %p45
      %p47 = scmp.ne.s32.totalorder %s36, %s39
      %p48 = scmp.eq.s32.totalorder %s19, 5
      %p49 = por %p47, %p48
      %p50 = scmp.ne.s32.totalorder %s39, %s40
      %p51 = scmp.eq.s32.totalorder %s19, 0
      %p52 = por %p50, %p51
      %p53 = scmp.ne.s32.totalorder %s39, %s40
      %p54 = scmp.eq.s32.totalorder %s20, 5
      %p55 = por %p53, %p54
      %p57 = scmp.ne.s32.totalorder %s40, %s56
      %p58 = scmp.eq.s32.totalorder %s20, 0
      %p59 = por %p57, %p58
      %s60 = ssub.s32 %s22, %s29
      %s61 = ssub.s32 %s21, %s33
      %s62 = sor.u32 %s60, %s61
      %p63 = scmp.eq.s32.totalorder %s62, 0
      %s65 = sadd.s32 %s64, 1
      %s66 = scalar_select %p63, %s64, %s65
      %p69 = pneg %p63
      %p70 = scmp.eq.s32.totalorder %s14, 5
      %p71 = por %p69, %p70
      %p72 = scmp.ne.s32.totalorder %s64, %s67
      %p73 = scmp.eq.s32.totalorder %s14, 0
      %p74 = por %p72, %p73
      %p75 = scmp.ne.s32.totalorder %s64, %s67
      %p76 = scmp.eq.s32.totalorder %s19, 5
      %p77 = por %p75, %p76
      %p78 = scmp.ne.s32.totalorder %s67, %s68
      %p79 = scmp.eq.s32.totalorder %s19, 0
      %p80 = por %p78, %p79
      %p81 = scmp.ne.s32.totalorder %s67, %s68
      %p82 = scmp.eq.s32.totalorder %s20, 5
      %p83 = por %p81, %p82
      %p85 = scmp.ne.s32.totalorder %s68, %s84
      %p86 = scmp.eq.s32.totalorder %s20, 0
      %p87 = por %p85, %p86
      %s88 = ssub.s32 %s22, %s29
      %s89 = ssub.s32 %s21, %s33
      %s90 = sor.u32 %s88, %s89
      %p91 = scmp.eq.s32.totalorder %s90, 0
      %s93 = sadd.s32 %s92, 1
      %s94 = scalar_select %p91, %s92, %s93
      %p97 = pneg %p91
      %p98 = scmp.eq.s32.totalorder %s14, 5
      %p99 = por %p97, %p98
      %p100 = scmp.ne.s32.totalorder %s92, %s95
      %p101 = scmp.eq.s32.totalorder %s14, 0
      %p102 = por %p100, %p101
      %p103 = scmp.ne.s32.totalorder %s92, %s95
      %p104 = scmp.eq.s32.totalorder %s19, 5
      %p105 = por %p103, %p104
      %p106 = scmp.ne.s32.totalorder %s95, %s96
      %p107 = scmp.eq.s32.totalorder %s19, 0
      %p108 = por %p106, %p107
      %p109 = scmp.ne.s32.totalorder %s95, %s96
      %p110 = scmp.eq.s32.totalorder %s20, 5
      %p111 = por %p109, %p110
      %p113 = scmp.ne.s32.totalorder %s96, %s112
      %p114 = scmp.eq.s32.totalorder %s20, 0
      %p115 = por %p113, %p114
      %p116 = scmp.le.s32.totalorder 1, %s14
      %p117 = scmp.lt.s32.totalorder %s14, 7
      %p118 = pnand %p116, %p117
      %p119 = pneg %p118
      // Predicated region
      $region9: #{tpu_custom_call.1} parent=5 // pred_check
        _
      $region10: #{tpu_custom_call.1} parent=5 // pred_check_branch
        %121 = sbr.rel (%p118) target = $region12
      $region11: #{tpu_custom_call.1} parent=5 // pred_region
        %s122 = ssub.s32 %s14, 1
      $region12: #{tpu_custom_call.1} parent=5 // pred_fallthru
        _
      %p123 = scmp.lt.s32.totalorder %s14, 6
      // Predicated region
      $region13: #{tpu_custom_call.1} parent=5 // pred_check
        %p124 = pneg %p123
      $region14: #{tpu_custom_call.1} parent=5 // pred_check_branch
        %126 = sbr.rel (%p124) target = $region16
      $region15: #{tpu_custom_call.1} parent=5 // pred_region
        // Predicated region
        $region17: #{tpu_custom_call.1} parent=15 // pred_check
          %p127 = pneg %p46
        $region18: #{tpu_custom_call.1} parent=15 // pred_check_branch
          %129 = sbr.rel (%p127) target = $region20
        $region19: #{tpu_custom_call.1} parent=15 // pred_region
          %p130 = scmp.lt.s32.totalorder %s21, 2
          %s131 = scalar_select %p130, %s21, 2
          %s132 = smul.addr %s131, 2
          %s133 = smul.addr %s132, 8
          %s134 = scalar_lea.vmem %s0, %s133
        $region20: #{tpu_custom_call.1} parent=15 // pred_fallthru
          _
        // Predicated region
        $region21: #{tpu_custom_call.1} parent=15 // pred_check
          %p135 = pneg %p74
        $region22: #{tpu_custom_call.1} parent=15 // pred_check_branch
          %137 = sbr.rel (%p135) target = $region24
        $region23: #{tpu_custom_call.1} parent=15 // pred_region
          %s138 = sand.u32 %s64, 1
          %s139 = scalar_lea.sflag [#allocation4], %s138
          %s140 = sand.u32 %s64, 1
          %s141 = smul.addr %s140, 64
          %s142 = scalar_lea.vmem [#allocation3], %s141
          %s144 = ssub.s32 1024, 1024
          %145 = vsyncadd %s139, %s144
          %s146 = smul.addr %s21, 8
          %s147 = smul.addr %s22, 24
          %s148 = sadd.s32 %s146, %s147
          %s149 = smul.addr %s148, 128
          %s150 = scalar_lea.hbm %s1, %s149
          %s151 = sshll.u32 %s142, 4
          %s152 = int_to_ptr.vmem [resolvable:$true] %s151
          %157 = dma.hbm_to_vmem [thread:$0]  %s150, 1024, %s152, %s139, 256, 256, 16
        $region24: #{tpu_custom_call.1} parent=15 // pred_fallthru
          _
      $region16: #{tpu_custom_call.1} parent=5 // pred_fallthru
        _
      %p158 = scmp.le.s32.totalorder 1, %s14
      %p159 = scmp.lt.s32.totalorder %s14, 7
      %p160 = pnand %p158, %p159
      %p161 = pneg %p160
      // Predicated region
      $region25: #{tpu_custom_call.1} parent=5 // pred_check
        _
      $region26: #{tpu_custom_call.1} parent=5 // pred_check_branch
        %163 = sbr.rel (%p160) target = $region28
      $region27: #{tpu_custom_call.1} parent=5 // pred_region
        %s164 = ssub.s32 %s14, 1
        %s165 = sand.u32 %s67, 1
        %s166 = scalar_lea.sflag [#allocation4], %s165
        %s167 = sand.u32 %s67, 1
        %s168 = smul.addr %s167, 64
        %s169 = scalar_lea.vmem [#allocation3], %s168
        // Predicated region
        $region29: #{tpu_custom_call.1} parent=27 // pred_check
          %p170 = pneg %p80
        $region30: #{tpu_custom_call.1} parent=27 // pred_check_branch
          %172 = sbr.rel (%p170) target = $region32
        $region31: #{tpu_custom_call.1} parent=27 // pred_region
          %173 = dma.done %s166, 1024
        $region32: #{tpu_custom_call.1} parent=27 // pred_fallthru
          _
        %p174 = scmp.lt.s32.totalorder %s23, 2
        %s175 = scalar_select %p174, %s23, 2
        %s176 = smul.addr %s175, 2
        %s177 = smul.addr %s176, 8
        %s178 = scalar_lea.vmem %s0, %s177
        %p179 = pneg %p52
        %p180 = pneg %p49
        %s181 = sand.u32 %s67, 1
        %s182 = scalar_lea.sflag [#allocation4], %s181
        %s183 = sand.u32 %s67, 1
        %s184 = smul.addr %s183, 64
        %s185 = scalar_lea.vmem [#allocation3], %s184
        %p186 = pneg %p80
        %p187 = pneg %p77
        %p188 = pneg %p108
        %p189 = pneg %p105
        %s190 = sand.u32 %s95, 1
        %s191 = scalar_lea.sflag [#allocation5], %s190
        %s192 = sand.u32 %s95, 1
        %s193 = smul.addr %s192, 3
        %s194 = scalar_lea.vmem [#allocation6], %s193
        %p195 = scmp.lt.s32.totalorder %s23, 2
        %s196 = scalar_select %p195, %s23, 2
        %s197 = smul.addr %s196, 2
        %s198 = smul.addr %s197, 8
        %s199 = scalar_lea.vmem %s0, %s198
        %v200 = vld [vmem:[%s199] sm:$0xff]
        %v201 = vld [vmem:[%s199 + $0x8] sm:$0x1]
        %v202 = vld [vmem:[%s169] sm:$0xff]
        %v203 = vld [vmem:[%s169 + $0x8] sm:$0xff]
        %v204 = vld [vmem:[%s169 + $0x10] sm:$0xff]
        %v205 = vld [vmem:[%s169 + $0x18] sm:$0xff]
        %v206 = vld [vmem:[%s169 + $0x20] sm:$0xff]
        %v207 = vld [vmem:[%s169 + $0x28] sm:$0xff]
        %v208 = vld [vmem:[%s169 + $0x30] sm:$0xff]
        %v209 = vld [vmem:[%s169 + $0x38] sm:$0xff]
        %vm210 = vcmask 261120
        %v212 = vsel %vm210, %v200, 0
        %v215 = vsel %vm210, %v201, 0
        %v217 = vand.u32 %v203, 4294901760
        %218 = vmatprep.subr.mxu0 %v217
        %v219 = vand.u32 %v202, 4294901760
        %220 = vmatpush1.msra.mxu0 %v219
        %v221 = vand.u32 %v205, 4294901760
        %222 = vmatprep.subr.mxu0 %v221
        %v223 = vand.u32 %v204, 4294901760
        %224 = vmatpush1.msra.mxu0 %v223
        %v225 = vand.u32 %v207, 4294901760
        %226 = vmatprep.subr.mxu0 %v225
        %v227 = vand.u32 %v206, 4294901760
        %228 = vmatpush1.msra.mxu0 %v227
        %v229 = vand.u32 %v209, 4294901760
        %230 = vmatprep.subr.mxu0 %v229
        %v231 = vand.u32 %v208, 4294901760
        %232 = vmatpush1.msra.mxu0 %v231
        %233 = vmatprep.subr.mxu0 0.0
        %234 = vmatpush1.msra.mxu0 0.0
        %235 = vmatprep.subr.mxu0 0.0
        %236 = vmatpush1.msra.mxu0 0.0
        %237 = vmatprep.subr.mxu0 0.0
        %238 = vmatpush1.msra.mxu0 0.0
        %239 = vmatprep.subr.mxu0 0.0
        %240 = vmatpush1.msra.mxu0 0.0
        %241 = vmatprep.subr.mxu0 0.0
        %242 = vmatpush1.msra.mxu0 0.0
        %243 = vmatprep.subr.mxu0 0.0
        %244 = vmatpush1.msra.mxu0 0.0
        %245 = vmatprep.subr.mxu0 0.0
        %246 = vmatpush1.msra.mxu0 0.0
        %247 = vmatprep.subr.mxu0 0.0
        %248 = vmatpush1.msra.mxu0 0.0
        %249 = vmatprep.subr.mxu0 0.0
        %250 = vmatpush1.msra.mxu0 0.0
        %251 = vmatprep.subr.mxu0 0.0
        %252 = vmatpush1.msra.mxu0 0.0
        %253 = vmatprep.subr.mxu0 0.0
        %254 = vmatpush1.msra.mxu0 0.0
        %255 = vmatprep.subr.mxu0 0.0
        %256 = vmatpush1.msra.mxu0 0.0
        %257 = vmatprep.subr.mxu0 0.0
        %258 = vmatpush1.msra.mxu0 0.0
        %259 = vmatprep.subr.mxu0 0.0
        %260 = vmatpush1.msra.mxu0 0.0
        %261 = vmatprep.subr.mxu0 0.0
        %262 = vmatpush1.msra.mxu0 0.0
        %263 = vmatprep.subr.mxu0 0.0
        %264 = vmatpush1.msra.mxu0 0.0
        %265 = vmatprep.subr.mxu0 0.0
        %266 = vmatpush1.msra.mxu0 0.0
        %267 = vmatprep.subr.mxu0 0.0
        %268 = vmatpush1.msra.mxu0 0.0
        %269 = vmatprep.subr.mxu0 0.0
        %270 = vmatpush1.msra.mxu0 0.0
        %271 = vmatprep.subr.mxu0 0.0
        %272 = vmatpush1.msra.mxu0 0.0
        %273 = vmatprep.subr.mxu0 0.0
        %274 = vmatpush1.msra.mxu0 0.0
        %275 = vmatprep.subr.mxu0 0.0
        %276 = vmatpush1.msra.mxu0 0.0
        %277 = vmatprep.subr.mxu0 0.0
        %278 = vmatpush1.msra.mxu0 0.0
        %279 = vmatprep.subr.mxu0 0.0
        %280 = vmatpush1.msra.mxu0 0.0
        %281 = vmatprep.subr.mxu0 0.0
        %282 = vmatpush1.msra.mxu0 0.0
        %283 = vmatprep.subr.mxu0 0.0
        %284 = vmatpush1.msra.mxu0 0.0
        %285 = vmatprep.subr.mxu0 0.0
        %286 = vmatpush1.msra.mxu0 0.0
        %287 = vmatprep.subr.mxu0 0.0
        %288 = vmatpush1.msra.mxu0 0.0
        %289 = vmatprep.mubr.f32.mxu0 0.0
        %v290 = vand.u32 %v212, 4294901760
        %v291 = vsub.f32 %v212, %v290
        %v292 = vand.u32 %v291, 4294901760
        %v293 = vsub.f32 %v291, %v292
        %v294 = vand.u32 %v293, 4294901760
        %295 = vmatmul.mubr.f32.gmra.mrb[0].mxu0 %v294
        %v296 = vpop.f32.mrb[0].mxu0
        %v297 = vadd.f32 0.0, %v296
        %v298 = vpop.f32.mrb[0].mxu0
        %v299 = vadd.f32 0.0, %v298
        %300 = vmatprep.mubr.f32.mxu0 0.0
        %v301 = vand.u32 %v215, 4294901760
        %v302 = vsub.f32 %v215, %v301
        %v303 = vand.u32 %v302, 4294901760
        %v304 = vsub.f32 %v302, %v303
        %v305 = vand.u32 %v304, 4294901760
        %306 = vmatmul.mubr.f32.gmra.mrb[0].mxu0 %v305
        %v307 = vpop.f32.mrb[0].mxu0
        %v308 = vadd.f32 0.0, %v307
        %v309 = vpop.f32.mrb[0].mxu0
        %v310 = vadd.f32 0.0, %v309
        %311 = vdwg.mxu0
        %v312 = vand.u32 %v203, 4294901760
        %v313 = vsub.f32 %v203, %v312
        %v314 = vand.u32 %v313, 4294901760
        %v315 = vsub.f32 %v313, %v314
        %v316 = vand.u32 %v315, 4294901760
        %317 = vmatprep.subr.mxu0 %v316
        %v318 = vand.u32 %v202, 4294901760
        %v319 = vsub.f32 %v202, %v318
        %v320 = vand.u32 %v319, 4294901760
        %v321 = vsub.f32 %v319, %v320
        %v322 = vand.u32 %v321, 4294901760
        %323 = vmatpush1.msra.mxu0 %v322
        %v324 = vand.u32 %v205, 4294901760
        %v325 = vsub.f32 %v205, %v324
        %v326 = vand.u32 %v325, 4294901760
        %v327 = vsub.f32 %v325, %v326
        %v328 = vand.u32 %v327, 4294901760
        %329 = vmatprep.subr.mxu0 %v328
        %v330 = vand.u32 %v204, 4294901760
        %v331 = vsub.f32 %v204, %v330
        %v332 = vand.u32 %v331, 4294901760
        %v333 = vsub.f32 %v331, %v332
        %v334 = vand.u32 %v333, 4294901760
        %335 = vmatpush1.msra.mxu0 %v334
        %v336 = vand.u32 %v207, 4294901760
        %v337 = vsub.f32 %v207, %v336
        %v338 = vand.u32 %v337, 4294901760
        %v339 = vsub.f32 %v337, %v338
        %v340 = vand.u32 %v339, 4294901760
        %341 = vmatprep.subr.mxu0 %v340
        %v342 = vand.u32 %v206, 4294901760
        %v343 = vsub.f32 %v206, %v342
        %v344 = vand.u32 %v343, 4294901760
        %v345 = vsub.f32 %v343, %v344
        %v346 = vand.u32 %v345, 4294901760
        %347 = vmatpush1.msra.mxu0 %v346
        %v348 = vand.u32 %v209, 4294901760
        %v349 = vsub.f32 %v209, %v348
        %v350 = vand.u32 %v349, 4294901760
        %v351 = vsub.f32 %v349, %v350
        %v352 = vand.u32 %v351, 4294901760
        %353 = vmatprep.subr.mxu0 %v352
        %v354 = vand.u32 %v208, 4294901760
        %v355 = vsub.f32 %v208, %v354
        %v356 = vand.u32 %v355, 4294901760
        %v357 = vsub.f32 %v355, %v356
        %v358 = vand.u32 %v357, 4294901760
        %359 = vmatpush1.msra.mxu0 %v358
        %360 = vmatprep.subr.mxu0 0.0
        %361 = vmatpush1.msra.mxu0 0.0
        %362 = vmatprep.subr.mxu0 0.0
        %363 = vmatpush1.msra.mxu0 0.0
        %364 = vmatprep.subr.mxu0 0.0
        %365 = vmatpush1.msra.mxu0 0.0
        %366 = vmatprep.subr.mxu0 0.0
        %367 = vmatpush1.msra.mxu0 0.0
        %368 = vmatprep.subr.mxu0 0.0
        %369 = vmatpush1.msra.mxu0 0.0
        %370 = vmatprep.subr.mxu0 0.0
        %371 = vmatpush1.msra.mxu0 0.0
        %372 = vmatprep.subr.mxu0 0.0
        %373 = vmatpush1.msra.mxu0 0.0
        %374 = vmatprep.subr.mxu0 0.0
        %375 = vmatpush1.msra.mxu0 0.0
        %376 = vmatprep.subr.mxu0 0.0
        %377 = vmatpush1.msra.mxu0 0.0
        %378 = vmatprep.subr.mxu0 0.0
        %379 = vmatpush1.msra.mxu0 0.0
        %380 = vmatprep.subr.mxu0 0.0
        %381 = vmatpush1.msra.mxu0 0.0
        %382 = vmatprep.subr.mxu0 0.0
        %383 = vmatpush1.msra.mxu0 0.0
        %384 = vmatprep.subr.mxu0 0.0
        %385 = vmatpush1.msra.mxu0 0.0
        %386 = vmatprep.subr.mxu0 0.0
        %387 = vmatpush1.msra.mxu0 0.0
        %388 = vmatprep.subr.mxu0 0.0
        %389 = vmatpush1.msra.mxu0 0.0
        %390 = vmatprep.subr.mxu0 0.0
        %391 = vmatpush1.msra.mxu0 0.0
        %392 = vmatprep.subr.mxu0 0.0
        %393 = vmatpush1.msra.mxu0 0.0
        %394 = vmatprep.subr.mxu0 0.0
        %395 = vmatpush1.msra.mxu0 0.0
        %396 = vmatprep.subr.mxu0 0.0
        %397 = vmatpush1.msra.mxu0 0.0
        %398 = vmatprep.subr.mxu0 0.0
        %399 = vmatpush1.msra.mxu0 0.0
        %400 = vmatprep.subr.mxu0 0.0
        %401 = vmatpush1.msra.mxu0 0.0
        %402 = vmatprep.subr.mxu0 0.0
        %403 = vmatpush1.msra.mxu0 0.0
        %404 = vmatprep.subr.mxu0 0.0
        %405 = vmatpush1.msra.mxu0 0.0
        %406 = vmatprep.subr.mxu0 0.0
        %407 = vmatpush1.msra.mxu0 0.0
        %408 = vmatprep.subr.mxu0 0.0
        %409 = vmatpush1.msra.mxu0 0.0
        %410 = vmatprep.subr.mxu0 0.0
        %411 = vmatpush1.msra.mxu0 0.0
        %412 = vmatprep.subr.mxu0 0.0
        %413 = vmatpush1.msra.mxu0 0.0
        %414 = vmatprep.subr.mxu0 0.0
        %415 = vmatpush1.msra.mxu0 0.0
        %416 = vmatprep.mubr.f32.mxu0 0.0
        %v417 = vand.u32 %v212, 4294901760
        %418 = vmatmul.mubr.f32.gmra.mrb[0].mxu0 %v417
        %v419 = vpop.f32.mrb[0].mxu0
        %v420 = vadd.f32 %v297, %v419
        %v421 = vpop.f32.mrb[0].mxu0
        %v422 = vadd.f32 %v299, %v421
        %423 = vmatprep.mubr.f32.mxu0 0.0
        %v424 = vand.u32 %v215, 4294901760
        %425 = vmatmul.mubr.f32.gmra.mrb[0].mxu0 %v424
        %v426 = vpop.f32.mrb[0].mxu0
        %v427 = vadd.f32 %v308, %v426
        %v428 = vpop.f32.mrb[0].mxu0
        %v429 = vadd.f32 %v310, %v428
        %430 = vdwg.mxu0
        %v431 = vand.u32 %v203, 4294901760
        %v432 = vsub.f32 %v203, %v431
        %433 = vmatprep.subr.mxu0 %v432
        %v434 = vand.u32 %v202, 4294901760
        %v435 = vsub.f32 %v202, %v434
        %436 = vmatpush1.msra.mxu0 %v435
        %v437 = vand.u32 %v205, 4294901760
        %v438 = vsub.f32 %v205, %v437
        %439 = vmatprep.subr.mxu0 %v438
        %v440 = vand.u32 %v204, 4294901760
        %v441 = vsub.f32 %v204, %v440
        %442 = vmatpush1.msra.mxu0 %v441
        %v443 = vand.u32 %v207, 4294901760
        %v444 = vsub.f32 %v207, %v443
        %445 = vmatprep.subr.mxu0 %v444
        %v446 = vand.u32 %v206, 4294901760
        %v447 = vsub.f32 %v206, %v446
        %448 = vmatpush1.msra.mxu0 %v447
        %v449 = vand.u32 %v209, 4294901760
        %v450 = vsub.f32 %v209, %v449
        %451 = vmatprep.subr.mxu0 %v450
        %v452 = vand.u32 %v208, 4294901760
        %v453 = vsub.f32 %v208, %v452
        %454 = vmatpush1.msra.mxu0 %v453
        %455 = vmatprep.subr.mxu0 0.0
        %456 = vmatpush1.msra.mxu0 0.0
        %457 = vmatprep.subr.mxu0 0.0
        %458 = vmatpush1.msra.mxu0 0.0
        %459 = vmatprep.subr.mxu0 0.0
        %460 = vmatpush1.msra.mxu0 0.0
        %461 = vmatprep.subr.mxu0 0.0
        %462 = vmatpush1.msra.mxu0 0.0
        %463 = vmatprep.subr.mxu0 0.0
        %464 = vmatpush1.msra.mxu0 0.0
        %465 = vmatprep.subr.mxu0 0.0
        %466 = vmatpush1.msra.mxu0 0.0
        %467 = vmatprep.subr.mxu0 0.0
        %468 = vmatpush1.msra.mxu0 0.0
        %469 = vmatprep.subr.mxu0 0.0
        %470 = vmatpush1.msra.mxu0 0.0
        %471 = vmatprep.subr.mxu0 0.0
        %472 = vmatpush1.msra.mxu0 0.0
        %473 = vmatprep.subr.mxu0 0.0
        %474 = vmatpush1.msra.mxu0 0.0
        %475 = vmatprep.subr.mxu0 0.0
        %476 = vmatpush1.msra.mxu0 0.0
        %477 = vmatprep.subr.mxu0 0.0
        %478 = vmatpush1.msra.mxu0 0.0
        %479 = vmatprep.subr.mxu0 0.0
        %480 = vmatpush1.msra.mxu0 0.0
        %481 = vmatprep.subr.mxu0 0.0
        %482 = vmatpush1.msra.mxu0 0.0
        %483 = vmatprep.subr.mxu0 0.0
        %484 = vmatpush1.msra.mxu0 0.0
        %485 = vmatprep.subr.mxu0 0.0
        %486 = vmatpush1.msra.mxu0 0.0
        %487 = vmatprep.subr.mxu0 0.0
        %488 = vmatpush1.msra.mxu0 0.0
        %489 = vmatprep.subr.mxu0 0.0
        %490 = vmatpush1.msra.mxu0 0.0
        %491 = vmatprep.subr.mxu0 0.0
        %492 = vmatpush1.msra.mxu0 0.0
        %493 = vmatprep.subr.mxu0 0.0
        %494 = vmatpush1.msra.mxu0 0.0
        %495 = vmatprep.subr.mxu0 0.0
        %496 = vmatpush1.msra.mxu0 0.0
        %497 = vmatprep.subr.mxu0 0.0
        %498 = vmatpush1.msra.mxu0 0.0
        %499 = vmatprep.subr.mxu0 0.0
        %500 = vmatpush1.msra.mxu0 0.0
        %501 = vmatprep.subr.mxu0 0.0
        %502 = vmatpush1.msra.mxu0 0.0
        %503 = vmatprep.subr.mxu0 0.0
        %504 = vmatpush1.msra.mxu0 0.0
        %505 = vmatprep.subr.mxu0 0.0
        %506 = vmatpush1.msra.mxu0 0.0
        %507 = vmatprep.subr.mxu0 0.0
        %508 = vmatpush1.msra.mxu0 0.0
        %509 = vmatprep.subr.mxu0 0.0
        %510 = vmatpush1.msra.mxu0 0.0
        %511 = vmatprep.mubr.f32.mxu0 0.0
        %v512 = vand.u32 %v212, 4294901760
        %v513 = vsub.f32 %v212, %v512
        %514 = vmatmul.mubr.f32.gmra.mrb[0].mxu0 %v513
        %v515 = vpop.f32.mrb[0].mxu0
        %v516 = vadd.f32 %v420, %v515
        %v517 = vpop.f32.mrb[0].mxu0
        %v518 = vadd.f32 %v422, %v517
        %519 = vmatprep.mubr.f32.mxu0 0.0
        %v520 = vand.u32 %v215, 4294901760
        %v521 = vsub.f32 %v215, %v520
        %522 = vmatmul.mubr.f32.gmra.mrb[0].mxu0 %v521
        %v523 = vpop.f32.mrb[0].mxu0
        %v524 = vadd.f32 %v427, %v523
        %v525 = vpop.f32.mrb[0].mxu0
        %v526 = vadd.f32 %v429, %v525
        %527 = vdwg.mxu0
        %v528 = vand.u32 %v203, 4294901760
        %529 = vmatprep.subr.mxu0 %v528
        %v530 = vand.u32 %v202, 4294901760
        %531 = vmatpush1.msra.mxu0 %v530
        %v532 = vand.u32 %v205, 4294901760
        %533 = vmatprep.subr.mxu0 %v532
        %v534 = vand.u32 %v204, 4294901760
        %535 = vmatpush1.msra.mxu0 %v534
        %v536 = vand.u32 %v207, 4294901760
        %537 = vmatprep.subr.mxu0 %v536
        %v538 = vand.u32 %v206, 4294901760
        %539 = vmatpush1.msra.mxu0 %v538
        %v540 = vand.u32 %v209, 4294901760
        %541 = vmatprep.subr.mxu0 %v540
        %v542 = vand.u32 %v208, 4294901760
        %543 = vmatpush1.msra.mxu0 %v542
        %544 = vmatprep.subr.mxu0 0.0
        %545 = vmatpush1.msra.mxu0 0.0
        %546 = vmatprep.subr.mxu0 0.0
        %547 = vmatpush1.msra.mxu0 0.0
        %548 = vmatprep.subr.mxu0 0.0
        %549 = vmatpush1.msra.mxu0 0.0
        %550 = vmatprep.subr.mxu0 0.0
        %551 = vmatpush1.msra.mxu0 0.0
        %552 = vmatprep.subr.mxu0 0.0
        %553 = vmatpush1.msra.mxu0 0.0
        %554 = vmatprep.subr.mxu0 0.0
        %555 = vmatpush1.msra.mxu0 0.0
        %556 = vmatprep.subr.mxu0 0.0
        %557 = vmatpush1.msra.mxu0 0.0
        %558 = vmatprep.subr.mxu0 0.0
        %559 = vmatpush1.msra.mxu0 0.0
        %560 = vmatprep.subr.mxu0 0.0
        %561 = vmatpush1.msra.mxu0 0.0
        %562 = vmatprep.subr.mxu0 0.0
        %563 = vmatpush1.msra.mxu0 0.0
        %564 = vmatprep.subr.mxu0 0.0
        %565 = vmatpush1.msra.mxu0 0.0
        %566 = vmatprep.subr.mxu0 0.0
        %567 = vmatpush1.msra.mxu0 0.0
        %568 = vmatprep.subr.mxu0 0.0
        %569 = vmatpush1.msra.mxu0 0.0
        %570 = vmatprep.subr.mxu0 0.0
        %571 = vmatpush1.msra.mxu0 0.0
        %572 = vmatprep.subr.mxu0 0.0
        %573 = vmatpush1.msra.mxu0 0.0
        %574 = vmatprep.subr.mxu0 0.0
        %575 = vmatpush1.msra.mxu0 0.0
        %576 = vmatprep.subr.mxu0 0.0
        %577 = vmatpush1.msra.mxu0 0.0
        %578 = vmatprep.subr.mxu0 0.0
        %579 = vmatpush1.msra.mxu0 0.0
        %580 = vmatprep.subr.mxu0 0.0
        %581 = vmatpush1.msra.mxu0 0.0
        %582 = vmatprep.subr.mxu0 0.0
        %583 = vmatpush1.msra.mxu0 0.0
        %584 = vmatprep.subr.mxu0 0.0
        %585 = vmatpush1.msra.mxu0 0.0
        %586 = vmatprep.subr.mxu0 0.0
        %587 = vmatpush1.msra.mxu0 0.0
        %588 = vmatprep.subr.mxu0 0.0
        %589 = vmatpush1.msra.mxu0 0.0
        %590 = vmatprep.subr.mxu0 0.0
        %591 = vmatpush1.msra.mxu0 0.0
        %592 = vmatprep.subr.mxu0 0.0
        %593 = vmatpush1.msra.mxu0 0.0
        %594 = vmatprep.subr.mxu0 0.0
        %595 = vmatpush1.msra.mxu0 0.0
        %596 = vmatprep.subr.mxu0 0.0
        %597 = vmatpush1.msra.mxu0 0.0
        %598 = vmatprep.subr.mxu0 0.0
        %599 = vmatpush1.msra.mxu0 0.0
        %600 = vmatprep.mubr.f32.mxu0 0.0
        %v601 = vand.u32 %v212, 4294901760
        %v602 = vsub.f32 %v212, %v601
        %v603 = vand.u32 %v602, 4294901760
        %604 = vmatmul.mubr.f32.gmra.mrb[0].mxu0 %v603
        %v605 = vpop.f32.mrb[0].mxu0
        %v606 = vadd.f32 %v516, %v605
        %v607 = vpop.f32.mrb[0].mxu0
        %v608 = vadd.f32 %v518, %v607
        %609 = vmatprep.mubr.f32.mxu0 0.0
        %v610 = vand.u32 %v215, 4294901760
        %v611 = vsub.f32 %v215, %v610
        %v612 = vand.u32 %v611, 4294901760
        %613 = vmatmul.mubr.f32.gmra.mrb[0].mxu0 %v612
        %v614 = vpop.f32.mrb[0].mxu0
        %v615 = vadd.f32 %v524, %v614
        %v616 = vpop.f32.mrb[0].mxu0
        %v617 = vadd.f32 %v526, %v616
        %618 = vdwg.mxu0
        %v619 = vand.u32 %v203, 4294901760
        %v620 = vsub.f32 %v203, %v619
        %v621 = vand.u32 %v620, 4294901760
        %622 = vmatprep.subr.mxu0 %v621
        %v623 = vand.u32 %v202, 4294901760
        %v624 = vsub.f32 %v202, %v623
        %v625 = vand.u32 %v624, 4294901760
        %626 = vmatpush1.msra.mxu0 %v625
        %v627 = vand.u32 %v205, 4294901760
        %v628 = vsub.f32 %v205, %v627
        %v629 = vand.u32 %v628, 4294901760
        %630 = vmatprep.subr.mxu0 %v629
        %v631 = vand.u32 %v204, 4294901760
        %v632 = vsub.f32 %v204, %v631
        %v633 = vand.u32 %v632, 4294901760
        %634 = vmatpush1.msra.mxu0 %v633
        %v635 = vand.u32 %v207, 4294901760
        %v636 = vsub.f32 %v207, %v635
        %v637 = vand.u32 %v636, 4294901760
        %638 = vmatprep.subr.mxu0 %v637
        %v639 = vand.u32 %v206, 4294901760
        %v640 = vsub.f32 %v206, %v639
        %v641 = vand.u32 %v640, 4294901760
        %642 = vmatpush1.msra.mxu0 %v641
        %v643 = vand.u32 %v209, 4294901760
        %v644 = vsub.f32 %v209, %v643
        %v645 = vand.u32 %v644, 4294901760
        %646 = vmatprep.subr.mxu0 %v645
        %v647 = vand.u32 %v208, 4294901760
        %v648 = vsub.f32 %v208, %v647
        %v649 = vand.u32 %v648, 4294901760
        %650 = vmatpush1.msra.mxu0 %v649
        %651 = vmatprep.subr.mxu0 0.0
        %652 = vmatpush1.msra.mxu0 0.0
        %653 = vmatprep.subr.mxu0 0.0
        %654 = vmatpush1.msra.mxu0 0.0
        %655 = vmatprep.subr.mxu0 0.0
        %656 = vmatpush1.msra.mxu0 0.0
        %657 = vmatprep.subr.mxu0 0.0
        %658 = vmatpush1.msra.mxu0 0.0
        %659 = vmatprep.subr.mxu0 0.0
        %660 = vmatpush1.msra.mxu0 0.0
        %661 = vmatprep.subr.mxu0 0.0
        %662 = vmatpush1.msra.mxu0 0.0
        %663 = vmatprep.subr.mxu0 0.0
        %664 = vmatpush1.msra.mxu0 0.0
        %665 = vmatprep.subr.mxu0 0.0
        %666 = vmatpush1.msra.mxu0 0.0
        %667 = vmatprep.subr.mxu0 0.0
        %668 = vmatpush1.msra.mxu0 0.0
        %669 = vmatprep.subr.mxu0 0.0
        %670 = vmatpush1.msra.mxu0 0.0
        %671 = vmatprep.subr.mxu0 0.0
        %672 = vmatpush1.msra.mxu0 0.0
        %673 = vmatprep.subr.mxu0 0.0
        %674 = vmatpush1.msra.mxu0 0.0
        %675 = vmatprep.subr.mxu0 0.0
        %676 = vmatpush1.msra.mxu0 0.0
        %677 = vmatprep.subr.mxu0 0.0
        %678 = vmatpush1.msra.mxu0 0.0
        %679 = vmatprep.subr.mxu0 0.0
        %680 = vmatpush1.msra.mxu0 0.0
        %681 = vmatprep.subr.mxu0 0.0
        %682 = vmatpush1.msra.mxu0 0.0
        %683 = vmatprep.subr.mxu0 0.0
        %684 = vmatpush1.msra.mxu0 0.0
        %685 = vmatprep.subr.mxu0 0.0
        %686 = vmatpush1.msra.mxu0 0.0
        %687 = vmatprep.subr.mxu0 0.0
        %688 = vmatpush1.msra.mxu0 0.0
        %689 = vmatprep.subr.mxu0 0.0
        %690 = vmatpush1.msra.mxu0 0.0
        %691 = vmatprep.subr.mxu0 0.0
        %692 = vmatpush1.msra.mxu0 0.0
        %693 = vmatprep.subr.mxu0 0.0
        %694 = vmatpush1.msra.mxu0 0.0
        %695 = vmatprep.subr.mxu0 0.0
        %696 = vmatpush1.msra.mxu0 0.0
        %697 = vmatprep.subr.mxu0 0.0
        %698 = vmatpush1.msra.mxu0 0.0
        %699 = vmatprep.subr.mxu0 0.0
        %700 = vmatpush1.msra.mxu0 0.0
        %701 = vmatprep.subr.mxu0 0.0
        %702 = vmatpush1.msra.mxu0 0.0
        %703 = vmatprep.subr.mxu0 0.0
        %704 = vmatpush1.msra.mxu0 0.0
        %705 = vmatprep.subr.mxu0 0.0
        %706 = vmatpush1.msra.mxu0 0.0
        %707 = vmatprep.mubr.f32.mxu0 0.0
        %v708 = vand.u32 %v212, 4294901760
        %709 = vmatmul.mubr.f32.gmra.mrb[0].mxu0 %v708
        %v710 = vpop.f32.mrb[0].mxu0
        %v711 = vadd.f32 %v606, %v710
        %v712 = vpop.f32.mrb[0].mxu0
        %v713 = vadd.f32 %v608, %v712
        %714 = vmatprep.mubr.f32.mxu0 0.0
        %v715 = vand.u32 %v215, 4294901760
        %716 = vmatmul.mubr.f32.gmra.mrb[0].mxu0 %v715
        %v717 = vpop.f32.mrb[0].mxu0
        %v718 = vadd.f32 %v615, %v717
        %v719 = vpop.f32.mrb[0].mxu0
        %v720 = vadd.f32 %v617, %v719
        %721 = vdwg.mxu0
        %v722 = vand.u32 %v203, 4294901760
        %723 = vmatprep.subr.mxu0 %v722
        %v724 = vand.u32 %v202, 4294901760
        %725 = vmatpush1.msra.mxu0 %v724
        %v726 = vand.u32 %v205, 4294901760
        %727 = vmatprep.subr.mxu0 %v726
        %v728 = vand.u32 %v204, 4294901760
        %729 = vmatpush1.msra.mxu0 %v728
        %v730 = vand.u32 %v207, 4294901760
        %731 = vmatprep.subr.mxu0 %v730
        %v732 = vand.u32 %v206, 4294901760
        %733 = vmatpush1.msra.mxu0 %v732
        %v734 = vand.u32 %v209, 4294901760
        %735 = vmatprep.subr.mxu0 %v734
        %v736 = vand.u32 %v208, 4294901760
        %737 = vmatpush1.msra.mxu0 %v736
        %738 = vmatprep.subr.mxu0 0.0
        %739 = vmatpush1.msra.mxu0 0.0
        %740 = vmatprep.subr.mxu0 0.0
        %741 = vmatpush1.msra.mxu0 0.0
        %742 = vmatprep.subr.mxu0 0.0
        %743 = vmatpush1.msra.mxu0 0.0
        %744 = vmatprep.subr.mxu0 0.0
        %745 = vmatpush1.msra.mxu0 0.0
        %746 = vmatprep.subr.mxu0 0.0
        %747 = vmatpush1.msra.mxu0 0.0
        %748 = vmatprep.subr.mxu0 0.0
        %749 = vmatpush1.msra.mxu0 0.0
        %750 = vmatprep.subr.mxu0 0.0
        %751 = vmatpush1.msra.mxu0 0.0
        %752 = vmatprep.subr.mxu0 0.0
        %753 = vmatpush1.msra.mxu0 0.0
        %754 = vmatprep.subr.mxu0 0.0
        %755 = vmatpush1.msra.mxu0 0.0
        %756 = vmatprep.subr.mxu0 0.0
        %757 = vmatpush1.msra.mxu0 0.0
        %758 = vmatprep.subr.mxu0 0.0
        %759 = vmatpush1.msra.mxu0 0.0
        %760 = vmatprep.subr.mxu0 0.0
        %761 = vmatpush1.msra.mxu0 0.0
        %762 = vmatprep.subr.mxu0 0.0
        %763 = vmatpush1.msra.mxu0 0.0
        %764 = vmatprep.subr.mxu0 0.0
        %765 = vmatpush1.msra.mxu0 0.0
        %766 = vmatprep.subr.mxu0 0.0
        %767 = vmatpush1.msra.mxu0 0.0
        %768 = vmatprep.subr.mxu0 0.0
        %769 = vmatpush1.msra.mxu0 0.0
        %770 = vmatprep.subr.mxu0 0.0
        %771 = vmatpush1.msra.mxu0 0.0
        %772 = vmatprep.subr.mxu0 0.0
        %773 = vmatpush1.msra.mxu0 0.0
        %774 = vmatprep.subr.mxu0 0.0
        %775 = vmatpush1.msra.mxu0 0.0
        %776 = vmatprep.subr.mxu0 0.0
        %777 = vmatpush1.msra.mxu0 0.0
        %778 = vmatprep.subr.mxu0 0.0
        %779 = vmatpush1.msra.mxu0 0.0
        %780 = vmatprep.subr.mxu0 0.0
        %781 = vmatpush1.msra.mxu0 0.0
        %782 = vmatprep.subr.mxu0 0.0
        %783 = vmatpush1.msra.mxu0 0.0
        %784 = vmatprep.subr.mxu0 0.0
        %785 = vmatpush1.msra.mxu0 0.0
        %786 = vmatprep.subr.mxu0 0.0
        %787 = vmatpush1.msra.mxu0 0.0
        %788 = vmatprep.subr.mxu0 0.0
        %789 = vmatpush1.msra.mxu0 0.0
        %790 = vmatprep.subr.mxu0 0.0
        %791 = vmatpush1.msra.mxu0 0.0
        %792 = vmatprep.subr.mxu0 0.0
        %793 = vmatpush1.msra.mxu0 0.0
        %794 = vmatprep.mubr.f32.mxu0 0.0
        %v795 = vand.u32 %v212, 4294901760
        %796 = vmatmul.mubr.f32.gmra.mrb[0].mxu0 %v795
        %v797 = vpop.f32.mrb[0].mxu0
        %v798 = vadd.f32 %v711, %v797
        %v799 = vpop.f32.mrb[0].mxu0
        %v800 = vadd.f32 %v713, %v799
        %801 = vmatprep.mubr.f32.mxu0 0.0
        %v802 = vand.u32 %v215, 4294901760
        %803 = vmatmul.mubr.f32.gmra.mrb[0].mxu0 %v802
        %v804 = vpop.f32.mrb[0].mxu0
        %v805 = vadd.f32 %v718, %v804
        %v806 = vpop.f32.mrb[0].mxu0
        %v807 = vadd.f32 %v720, %v806
        %808 = vdwg.mxu0
        %809 = vst [vmem:[#allocation2] sm:$0xff] 0.0
        %810 = vst [vmem:[#allocation2 + $0x8] sm:$0xff] 0.0
        %vm811 = vcmask 580608
        %812 = vst.msk [vmem:[#allocation2 + $0x10] sm:$0xff] %vm811, 0.0
        %813 = vst [vmem:[#allocation2 + $0x18] sm:$0x1] 0.0
        %814 = vst [vmem:[#allocation2 + $0x20] sm:$0x1] 0.0
        %vm815 = vcmask 573440
        %816 = vst.msk [vmem:[#allocation2 + $0x28] sm:$0x1] %vm815, 0.0
        %819 = vrot.lane.b32.xlu0 %v798, 19
        %v820 = vpop.permute.xlu0 %819
        %821 = vrot.lane.b32.xlu0 %v805, 19
        %v822 = vpop.permute.xlu0 %821
        %vm825 = vcmask 285848
        %826 = vst.msk [vmem:[#allocation2] sm:$0xff] %vm825, %v820
        %vm827 = vcmask 278680
        %828 = vst.msk [vmem:[#allocation2 + $0x18] sm:$0x1] %vm827, %v822
        %829 = vrot.lane.b32.xlu0 %v798, 21
        %v830 = vpop.permute.xlu0 %829
        %831 = vrot.lane.b32.xlu0 %v805, 21
        %v832 = vpop.permute.xlu0 %831
        %vm835 = vcmask 433448
        %836 = vst.msk [vmem:[#allocation2] sm:$0xff] %vm835, %v830
        %vm837 = vcmask 426280
        %838 = vst.msk [vmem:[#allocation2 + $0x18] sm:$0x1] %vm837, %v832
        %839 = vrot.lane.b32.xlu0 %v798, 23
        %v840 = vpop.permute.xlu0 %839
        %841 = vrot.lane.b32.xlu0 %v805, 23
        %v842 = vpop.permute.xlu0 %841
        %vm845 = vcmask 581048
        %846 = vst.msk [vmem:[#allocation2] sm:$0xff] %vm845, %v840
        %vm847 = vcmask 573880
        %848 = vst.msk [vmem:[#allocation2 + $0x18] sm:$0x1] %vm847, %v842
        %849 = vrot.lane.b32.xlu0 %v798, 25
        %v850 = vpop.permute.xlu0 %849
        %851 = vrot.lane.b32.xlu0 %v805, 25
        %v852 = vpop.permute.xlu0 %851
        %vm855 = vcmask 728648
        %856 = vst.msk [vmem:[#allocation2] sm:$0xff] %vm855, %v850
        %vm857 = vcmask 721480
        %858 = vst.msk [vmem:[#allocation2 + $0x18] sm:$0x1] %vm857, %v852
        %859 = vrot.lane.b32.xlu0 %v798, 27
        %v860 = vpop.permute.xlu0 %859
        %861 = vrot.lane.b32.xlu0 %v805, 27
        %v862 = vpop.permute.xlu0 %861
        %vm865 = vcmask 876248
        %866 = vst.msk [vmem:[#allocation2] sm:$0xff] %vm865, %v860
        %vm867 = vcmask 869080
        %868 = vst.msk [vmem:[#allocation2 + $0x18] sm:$0x1] %vm867, %v862
        %869 = vrot.lane.b32.xlu0 %v798, 29
        %v870 = vpop.permute.xlu0 %869
        %871 = vrot.lane.b32.xlu0 %v805, 29
        %v872 = vpop.permute.xlu0 %871
        %vm875 = vcmask 1023848
        %876 = vst.msk [vmem:[#allocation2] sm:$0xff] %vm875, %v870
        %vm877 = vcmask 1016680
        %878 = vst.msk [vmem:[#allocation2 + $0x18] sm:$0x1] %vm877, %v872
        %879 = vrot.lane.b32.xlu0 %v798, 31
        %v880 = vpop.permute.xlu0 %879
        %881 = vrot.lane.b32.xlu0 %v805, 31
        %v882 = vpop.permute.xlu0 %881
        %vm885 = vcmask 1048568
        %886 = vst.msk [vmem:[#allocation2] sm:$0xff] %vm885, %v880
        %vm887 = vcmask 121856
        %888 = vst.msk [vmem:[#allocation2 + $0x8] sm:$0xff] %vm887, %v880
        %vm889 = vcmask 1041400
        %890 = vst.msk [vmem:[#allocation2 + $0x18] sm:$0x1] %vm889, %v882
        %vm891 = vcmask 114688
        %892 = vst.msk [vmem:[#allocation2 + $0x20] sm:$0x1] %vm891, %v882
        %893 = vrot.lane.b32.xlu0 %v798, 33
        %v894 = vpop.permute.xlu0 %893
        %895 = vrot.lane.b32.xlu0 %v805, 33
        %v896 = vpop.permute.xlu0 %895
        %vm899 = vcmask 269448
        %900 = vst.msk [vmem:[#allocation2 + $0x8] sm:$0xff] %vm899, %v894
        %vm901 = vcmask 262280
        %902 = vst.msk [vmem:[#allocation2 + $0x20] sm:$0x1] %vm901, %v896
        %905 = vrot.lane.b32.xlu0 %v800, 35
        %v906 = vpop.permute.xlu0 %905
        %907 = vrot.lane.b32.xlu0 %v807, 35
        %v908 = vpop.permute.xlu0 %907
        %vm911 = vcmask 417048
        %912 = vst.msk [vmem:[#allocation2 + $0x8] sm:$0xff] %vm911, %v906
        %vm913 = vcmask 409880
        %914 = vst.msk [vmem:[#allocation2 + $0x20] sm:$0x1] %vm913, %v908
        %915 = vrot.lane.b32.xlu0 %v800, 37
        %v916 = vpop.permute.xlu0 %915
        %917 = vrot.lane.b32.xlu0 %v807, 37
        %v918 = vpop.permute.xlu0 %917
        %vm921 = vcmask 564648
        %922 = vst.msk [vmem:[#allocation2 + $0x8] sm:$0xff] %vm921, %v916
        %vm923 = vcmask 557480
        %924 = vst.msk [vmem:[#allocation2 + $0x20] sm:$0x1] %vm923, %v918
        %925 = vrot.lane.b32.xlu0 %v800, 39
        %v926 = vpop.permute.xlu0 %925
        %927 = vrot.lane.b32.xlu0 %v807, 39
        %v928 = vpop.permute.xlu0 %927
        %vm931 = vcmask 712248
        %932 = vst.msk [vmem:[#allocation2 + $0x8] sm:$0xff] %vm931, %v926
        %vm933 = vcmask 705080
        %934 = vst.msk [vmem:[#allocation2 + $0x20] sm:$0x1] %vm933, %v928
        %935 = vrot.lane.b32.xlu0 %v800, 41
        %v936 = vpop.permute.xlu0 %935
        %937 = vrot.lane.b32.xlu0 %v807, 41
        %v938 = vpop.permute.xlu0 %937
        %vm941 = vcmask 859848
        %942 = vst.msk [vmem:[#allocation2 + $0x8] sm:$0xff] %vm941, %v936
        %vm943 = vcmask 852680
        %944 = vst.msk [vmem:[#allocation2 + $0x20] sm:$0x1] %vm943, %v938
        %945 = vrot.lane.b32.xlu0 %v800, 43
        %v946 = vpop.permute.xlu0 %945
        %947 = vrot.lane.b32.xlu0 %v807, 43
        %v948 = vpop.permute.xlu0 %947
        %vm951 = vcmask 1007448
        %952 = vst.msk [vmem:[#allocation2 + $0x8] sm:$0xff] %vm951, %v946
        %vm953 = vcmask 1000280
        %954 = vst.msk [vmem:[#allocation2 + $0x20] sm:$0x1] %vm953, %v948
        %955 = vrot.lane.b32.xlu0 %v800, 45
        %v956 = vpop.permute.xlu0 %955
        %957 = vrot.lane.b32.xlu0 %v807, 45
        %v958 = vpop.permute.xlu0 %957
        %vm961 = vcmask 1048552
        %962 = vst.msk [vmem:[#allocation2 + $0x8] sm:$0xff] %vm961, %v956
        %vm963 = vcmask 105472
        %964 = vst.msk [vmem:[#allocation2 + $0x10] sm:$0xff] %vm963, %v956
        %vm965 = vcmask 1041384
        %966 = vst.msk [vmem:[#allocation2 + $0x20] sm:$0x1] %vm965, %v958
        %vm967 = vcmask 98304
        %968 = vst.msk [vmem:[#allocation2 + $0x28] sm:$0x1] %vm967, %v958
        %969 = vrot.lane.b32.xlu0 %v800, 47
        %v970 = vpop.permute.xlu0 %969
        %971 = vrot.lane.b32.xlu0 %v807, 47
        %v972 = vpop.permute.xlu0 %971
        %vm975 = vcmask 253048
        %976 = vst.msk [vmem:[#allocation2 + $0x10] sm:$0xff] %vm975, %v970
        %vm977 = vcmask 245880
        %978 = vst.msk [vmem:[#allocation2 + $0x28] sm:$0x1] %vm977, %v972
        %979 = vrot.lane.b32.xlu0 %v800, 49
        %v980 = vpop.permute.xlu0 %979
        %981 = vrot.lane.b32.xlu0 %v807, 49
        %v982 = vpop.permute.xlu0 %981
        %vm985 = vcmask 400648
        %986 = vst.msk [vmem:[#allocation2 + $0x10] sm:$0xff] %vm985, %v980
        %vm987 = vcmask 393480
        %988 = vst.msk [vmem:[#allocation2 + $0x28] sm:$0x1] %vm987, %v982
        %v989 = vld [vmem:[#allocation2] sm:$0xff]
        %v990 = vld [vmem:[#allocation2 + $0x8] sm:$0xff]
        %v991 = vld [vmem:[#allocation2 + $0x10] sm:$0xff]
        %v992 = vld [vmem:[#allocation2 + $0x18] sm:$0x1]
        %v993 = vld [vmem:[#allocation2 + $0x20] sm:$0x1]
        %v994 = vld [vmem:[#allocation2 + $0x28] sm:$0x1]
        %v995 = vadd.f32 %v989, 0.0
        %v996 = vadd.f32 %v990, 0.0
        %v997 = vadd.f32 %v991, 0.0
        %v1001 = vrot.slane %v989, 1
        %v1002 = vrot.slane %v990, 1
        %v1003 = vrot.slane %v991, 1
        %1004 = vrot.lane.b32.xlu0 %v1001, 127
        %v1005 = vpop.permute.xlu0 %1004
        %1006 = vrot.lane.b32.xlu0 %v1002, 127
        %v1007 = vpop.permute.xlu0 %1006
        %1008 = vrot.lane.b32.xlu0 %v1003, 127
        %v1009 = vpop.permute.xlu0 %1008
        %vm1010 = vcmask 1039360
        %v1011 = vsel %vm1010, %v1005, %v1007
        %v1012 = vsel %vm1010, %v1007, %v1009
        %v1016 = vadd.f32 %v995, %v1011
        %v1017 = vadd.f32 %v996, %v1012
        %v1018 = vadd.f32 %v997, %v1009
        %v1019 = vrot.slane %v989, 2
        %v1020 = vrot.slane %v990, 2
        %v1021 = vrot.slane %v991, 2
        %1022 = vrot.lane.b32.xlu0 %v1019, 126
        %v1023 = vpop.permute.xlu0 %1022
        %1024 = vrot.lane.b32.xlu0 %v1020, 126
        %v1025 = vpop.permute.xlu0 %1024
        %1026 = vrot.lane.b32.xlu0 %v1021, 126
        %v1027 = vpop.permute.xlu0 %1026
        %vm1028 = vcmask 1031168
        %v1029 = vsel %vm1028, %v1023, %v1025
        %v1030 = vsel %vm1028, %v1025, %v1027
        %v1034 = vadd.f32 %v1016, %v1029
        %v1035 = vadd.f32 %v1017, %v1030
        %v1036 = vadd.f32 %v1018, %v1027
        %v1037 = vrot.slane %v989, 3
        %v1038 = vrot.slane %v990, 3
        %v1039 = vrot.slane %v991, 3
        %1040 = vrot.lane.b32.xlu0 %v1037, 110
        %v1041 = vpop.permute.xlu0 %1040
        %1042 = vrot.lane.b32.xlu0 %v1038, 110
        %v1043 = vpop.permute.xlu0 %1042
        %1044 = vrot.lane.b32.xlu0 %v1039, 110
        %v1045 = vpop.permute.xlu0 %1044
        %vm1046 = vcmask 900096
        %v1047 = vsel %vm1046, %v1041, %v1043
        %v1048 = vsel %vm1046, %v1043, %v1045
        %v1052 = vadd.f32 %v1034, %v1047
        %v1053 = vadd.f32 %v1035, %v1048
        %v1054 = vadd.f32 %v1036, %v1045
        %v1055 = vrot.slane %v989, 4
        %v1056 = vrot.slane %v990, 4
        %v1057 = vrot.slane %v991, 4
        %1058 = vrot.lane.b32.xlu0 %v1055, 109
        %v1059 = vpop.permute.xlu0 %1058
        %1060 = vrot.lane.b32.xlu0 %v1056, 109
        %v1061 = vpop.permute.xlu0 %1060
        %1062 = vrot.lane.b32.xlu0 %v1057, 109
        %v1063 = vpop.permute.xlu0 %1062
        %vm1064 = vcmask 891904
        %v1065 = vsel %vm1064, %v1059, %v1061
        %v1066 = vsel %vm1064, %v1061, %v1063
        %v1070 = vadd.f32 %v1052, %v1065
        %v1071 = vadd.f32 %v1053, %v1066
        %v1072 = vadd.f32 %v1054, %v1063
        %v1073 = vrot.slane %v989, 5
        %v1074 = vrot.slane %v990, 5
        %v1075 = vrot.slane %v991, 5
        %1076 = vrot.lane.b32.xlu0 %v1073, 108
        %v1077 = vpop.permute.xlu0 %1076
        %1078 = vrot.lane.b32.xlu0 %v1074, 108
        %v1079 = vpop.permute.xlu0 %1078
        %1080 = vrot.lane.b32.xlu0 %v1075, 108
        %v1081 = vpop.permute.xlu0 %1080
        %vm1082 = vcmask 883712
        %v1083 = vsel %vm1082, %v1077, %v1079
        %v1084 = vsel %vm1082, %v1079, %v1081
        %v1088 = vadd.f32 %v1070, %v1083
        %v1089 = vadd.f32 %v1071, %v1084
        %v1090 = vadd.f32 %v1072, %v1081
        %v1091 = vrot.slane %v989, 6
        %v1092 = vrot.slane %v990, 6
        %v1093 = vrot.slane %v991, 6
        %1094 = vrot.lane.b32.xlu0 %v1091, 92
        %v1095 = vpop.permute.xlu0 %1094
        %1096 = vrot.lane.b32.xlu0 %v1092, 92
        %v1097 = vpop.permute.xlu0 %1096
        %1098 = vrot.lane.b32.xlu0 %v1093, 92
        %v1099 = vpop.permute.xlu0 %1098
        %vm1100 = vcmask 752640
        %v1101 = vsel %vm1100, %v1095, %v1097
        %v1102 = vsel %vm1100, %v1097, %v1099
        %v1106 = vadd.f32 %v1088, %v1101
        %v1107 = vadd.f32 %v1089, %v1102
        %v1108 = vadd.f32 %v1090, %v1099
        %v1109 = vrot.slane %v989, 7
        %v1110 = vrot.slane %v990, 7
        %v1111 = vrot.slane %v991, 7
        %1112 = vrot.lane.b32.xlu0 %v1109, 91
        %v1113 = vpop.permute.xlu0 %1112
        %1114 = vrot.lane.b32.xlu0 %v1110, 91
        %v1115 = vpop.permute.xlu0 %1114
        %1116 = vrot.lane.b32.xlu0 %v1111, 91
        %v1117 = vpop.permute.xlu0 %1116
        %vm1118 = vcmask 744448
        %v1119 = vsel %vm1118, %v1113, %v1115
        %v1120 = vsel %vm1118, %v1115, %v1117
        %v1124 = vadd.f32 %v1106, %v1119
        %v1125 = vadd.f32 %v1107, %v1120
        %v1126 = vadd.f32 %v1108, %v1117
        %1130 = vrot.lane.b32.xlu0 %v992, 90
        %v1131 = vpop.permute.xlu0 %1130
        %1132 = vrot.lane.b32.xlu0 %v993, 90
        %v1133 = vpop.permute.xlu0 %1132
        %1134 = vrot.lane.b32.xlu0 %v994, 90
        %v1135 = vpop.permute.xlu0 %1134
        %vm1136 = vcmask 736256
        %v1137 = vsel %vm1136, %v1131, %v1133
        %v1138 = vsel %vm1136, %v1133, %v1135
        %v1142 = vadd.f32 %v1124, %v1137
        %v1143 = vadd.f32 %v1125, %v1138
        %v1144 = vadd.f32 %v1126, %v1135
        %v1148 = vcombine.low %v1142, %v1143
        %v1150 = vunpack.c.l.s4 1966171168
        %v1151 = vunpack.c.0.s8 %v1150
        %v1152 = vlaneseq
        %v1153 = vshrl.u32 %v1152, 7
        %v1154 = vsub.s32 %v1151, %v1153
        %v1155 = vrot.slane %v1148, %v1154
        %v1157 = vunpack.c.l.s4 1966171168
        %v1158 = vunpack.c.0.s8 %v1157
        %v1159 = vlaneseq
        %v1160 = vshrl.u32 %v1159, 7
        %v1161 = vsub.s32 %v1158, %v1160
        %v1162 = vrot.slane %v1144, %v1161
        %v1163 = vcombine.low %v1155, %v1162
        %v1165 = vunpack.c.l.s4 1966171168
        %v1166 = vunpack.c.0.s8 %v1165
        %v1167 = vlaneseq
        %v1168 = vshrl.u32 %v1167, 7
        %v1169 = vsub.s32 %v1166, %v1168
        %v1170 = vrot.slane %v1163, %v1169
        %v1172 = vlaneseq
        %vm1173 = vcmp.ge.s32.totalorder %v1172, 0
        %vm1174 = vcmp.lt.s32.totalorder %v1172, 288
        %vm1175 = vmand %vm1173, %vm1174
        %1176 = vst.msk [vmem:[%s194] sm:$0x7] %vm1175, %v1170
        %s1177 = sand.u32 %s95, 1
        %s1178 = scalar_lea.sflag [#allocation5], %s1177
        %s1179 = sand.u32 %s95, 1
        %s1180 = smul.addr %s1179, 3
        %s1181 = scalar_lea.vmem [#allocation6], %s1180
        // Predicated region
        $region33: #{tpu_custom_call.1} parent=27 // pred_check
          %p1182 = pneg %p105
        $region34: #{tpu_custom_call.1} parent=27 // pred_check_branch
          %1184 = sbr.rel (%p1182) target = $region36
        $region35: #{tpu_custom_call.1} parent=27 // pred_region
          %s1186 = ssub.s32 48, 48
          %1187 = vsyncadd %s1178, %s1186
          %s1188 = smul.addr %s23, 3
          %s1189 = smul.addr %s24, 9
          %s1190 = sadd.s32 %s1188, %s1189
          %s1191 = smul.addr %s1190, 16
          %s1192 = scalar_lea.hbm %s2, %s1191
          %s1194 = sshll.u32 %s1181, 4
          %s1195 = int_to_ptr.vmem [resolvable:$true] %s1194
          %1197 = dma.vmem_to_hbm [thread:$0]  %s1195, 48, %s1192, %s1178
        $region36: #{tpu_custom_call.1} parent=27 // pred_fallthru
          _
      $region28: #{tpu_custom_call.1} parent=5 // pred_fallthru
        _
      %p1198 = scmp.le.s32.totalorder 2, %s14
      // Predicated region
      $region37: #{tpu_custom_call.1} parent=5 // pred_check
        %p1199 = pneg %p1198
      $region38: #{tpu_custom_call.1} parent=5 // pred_check_branch
        %1201 = sbr.rel (%p1199) target = $region40
      $region39: #{tpu_custom_call.1} parent=5 // pred_region
        %s1202 = ssub.s32 %s14, 2
        // Predicated region
        $region41: #{tpu_custom_call.1} parent=39 // pred_check
          %p1203 = pneg %p111
        $region42: #{tpu_custom_call.1} parent=39 // pred_check_branch
          %1205 = sbr.rel (%p1203) target = $region44
        $region43: #{tpu_custom_call.1} parent=39 // pred_region
          %s1206 = sand.u32 %s96, 1
          %s1207 = scalar_lea.sflag [#allocation5], %s1206
          %s1208 = sand.u32 %s96, 1
          %s1209 = smul.addr %s1208, 3
          %s1210 = scalar_lea.vmem [#allocation6], %s1209
          %1211 = dma.done %s1207, 48
        $region44: #{tpu_custom_call.1} parent=39 // pred_fallthru
          _
      $region40: #{tpu_custom_call.1} parent=5 // pred_fallthru
        _
    $region6: #{tpu_custom_call.1} parent=1 // loop_footer
      %s18 = sadd.s32 1, %s14
    $region7: #{tpu_custom_call.1} parent=1 // loop_footer_branch
      %13 = sbr.rel target = $region3
    $region8: #{tpu_custom_call.1} parent=1 // loop_exit
      _
    %1212 = vsyncpa [#allocation4], 1
    %s1213 = scalar_lea.sflag [#allocation4], 1
    %1214 = vsyncpa %s1213, 1
    %1215 = vsyncpa [#allocation5], 1
    %s1216 = scalar_lea.sflag [#allocation5], 1
    %1217 = vsyncpa %s1216, 1

</llo_original>
